<compile_context>
chip_gen: v7x
topology: tpu7x:2x2x1
jax: 0.10.0
libtpu: 0.0.40
codegen_flags: <defaults>
</compile_context>

<pallas_src>
import functools
import math

import jax
import jax.numpy as jnp
from jax.experimental import pallas as pl
from jax.experimental.pallas import tpu as pltpu


_HALF_LOG_2PI = 0.9189385332046727  # 0.5 * log(2*pi)


def _round_up(x, mult):
    return ((x + mult - 1) // mult) * mult


def _log_beta(a, b, s):
    """log B(a, b) = lgamma(a) + lgamma(b) - lgamma(a + b), for a, b > 0.

    Shifted Stirling series (z = x + 6) with all three lgamma calls fused:
        lgamma(x) = (z - 0.5) log z - z + 0.5 log(2 pi) + 1/(12 z) - log P(x),
        P(x) = x (x+1) (x+2) (x+3) (x+4) (x+5).
    The -z terms and constants collapse to (0.5 log(2 pi) - 6); the three
    1/(12 z) corrections collapse into a single fraction (one approx
    reciprocal); the three Pochhammer logs collapse into log((Pa/Ps)*Pb)
    (one log + one divide, and Pa/Ps <= 1 so no f32 overflow even for very
    large parameters).

    EUP cost: 4 logs + 1 approx reciprocal + 1 divide per call.  The truncated
    series error is < ~3e-5 absolute for all a, b > 0 -- far below the 1e-3
    accuracy target of the loss.
    """
    za = a + 6.0
    zb = b + 6.0
    zs = s + 6.0

    pa = a * (a + 1.0) * (a + 2.0) * (a + 3.0) * (a + 4.0) * (a + 5.0)
    pb = b * (b + 1.0) * (b + 2.0) * (b + 3.0) * (b + 4.0) * (b + 5.0)
    ps = s * (s + 1.0) * (s + 2.0) * (s + 3.0) * (s + 4.0) * (s + 5.0)

    f_part = ((za - 0.5) * jnp.log(za) + (zb - 0.5) * jnp.log(zb)
              - (zs - 0.5) * jnp.log(zs) + (_HALF_LOG_2PI - 6.0))
    # 1/(12 za) + 1/(12 zb) - 1/(12 zs), combined into a single reciprocal.
    corr = ((zb * zs + za * zs - za * zb)
            * pl.reciprocal(12.0 * za * zb * zs, approx=True))
    # -log Pa - log Pb + log Ps, combined into a single log (overflow-safe).
    log_poch = jnp.log((pa / ps) * pb)
    return f_part + corr - log_poch


def _mbeta_nll_kernel(a1_ref, b1_ref, a2_ref, b2_ref, w1_ref, w2_ref, y_ref,
                      out_ref, *, steps, tile_rows, n_valid):
    c = pl.program_id(0)   # core / partial-accumulator index ("parallel")
    k = pl.program_id(1)   # reduction step                   ("arbitrary")

    @pl.when(k == 0)
    def _init():
        out_ref[...] = jnp.zeros_like(out_ref)

    a1 = a1_ref[...]
    b1 = b1_ref[...]
    a2 = a2_ref[...]
    b2 = b2_ref[...]
    w1 = w1_ref[...]
    w2 = w2_ref[...]
    y = jnp.clip(y_ref[...], 1e-6, 1.0 - 1e-6)

    log_y = jnp.log(y)
    log_1my = jnp.log(1.0 - y)

    s1 = a1 + b1
    s2 = a2 + b2

    # Beta log-likelihoods: (a-1) log y + (b-1) log(1-y) - log B(a, b).
    ll1 = (a1 - 1.0) * log_y + (b1 - 1.0) * log_1my - _log_beta(a1, b1, s1)
    ll2 = (a2 - 1.0) * log_y + (b2 - 1.0) * log_1my - _log_beta(a2, b2, s2)

    # Mixture NLL in log-space anchored at max(ll1, ll2): one exp + one log,
    # no overflow/underflow of exp(ll).
    ll_max = jnp.maximum(ll1, ll2)
    ll_min = jnp.minimum(ll1, ll2)
    first_is_max = ll1 >= ll2
    w_max = jnp.where(first_is_max, w1, w2)
    w_min = jnp.where(first_is_max, w2, w1)
    loss = -(ll_max + jnp.log(w_max + w_min * jnp.exp(ll_min - ll_max)))

    # Predicted mixture mean with a single reciprocal:
    # w1*a1/s1 + w2*a2/s2 == (w1*a1*s2 + w2*a2*s1) / (s1*s2)
    pred_mean = (w1 * a1 * s2 + w2 * a2 * s1) * pl.reciprocal(s1 * s2,
                                                              approx=True)
    l1_term = jnp.abs(pred_mean - y)

    # Fused contribution: mean(loss) + 0.2*mean(L1) == sum(contrib)/n.
    contrib = loss + 0.2 * l1_term

    # Mask out padded elements (padding values are benign but not exact).
    row0 = (c * steps + k) * tile_rows
    rows = jax.lax.broadcasted_iota(jnp.int32, contrib.shape, 0)
    lanes = jax.lax.broadcasted_iota(jnp.int32, contrib.shape, 1)
    idx = (row0 + rows) * 128 + lanes
    contrib = jnp.where(idx < n_valid, contrib, 0.0)

    # vreg-shaped accumulation: pure VPU adds per step; the single cross-lane
    # reduction over (n_splits, 8, 128) happens in the wrapper epilogue.
    partial = contrib.reshape(tile_rows // 8, 8, 128).sum(axis=0)
    out_ref[...] += partial.reshape(1, 8, 128)


def mixture_beta_nll_loss(alpha1, beta1, alpha2, beta2, weights, y_true,
                          *, tile_rows=1024, n_splits=2):
    n = int(y_true.size)
    assert n > 0

    m = -(-n // 128)                              # rows of 128 lanes needed
    per_split_rows = -(-m // n_splits)
    eff_tile = min(tile_rows, _round_up(max(per_split_rows, 8), 8))
    eff_tile = _round_up(max(eff_tile, 8), 8)
    steps = -(-per_split_rows // eff_tile)
    m_pad = n_splits * steps * eff_tile
    n_pad = m_pad * 128

    def flat(x, pad_value):
        v = x.astype(jnp.float32).reshape(-1)
        v = jnp.pad(v, (0, n_pad - n), constant_values=pad_value)
        return v.reshape(m_pad, 128)

    # Benign padding: a=b=1, w=0.5, y=0.5 keeps all math finite; the kernel
    # masks padded elements exactly anyway.
    a1 = flat(alpha1, 1.0)
    b1 = flat(beta1, 1.0)
    a2 = flat(alpha2, 1.0)
    b2 = flat(beta2, 1.0)
    w = weights.astype(jnp.float32)
    # TODO(synk): the stride-2 lane de-interleave of weights is done here as a
    # single XLA copy; an in-kernel lane-strided gather has no clean Pallas
    # equivalent on TPU.
    w1 = flat(w[..., 0], 0.5)
    w2 = flat(w[..., 1], 0.5)
    y = flat(y_true, 0.5)

    tile_spec = pl.BlockSpec((eff_tile, 128), lambda c, k: (c * steps + k, 0))

    partials = pl.pallas_call(
        functools.partial(_mbeta_nll_kernel,
                          steps=steps, tile_rows=eff_tile, n_valid=n),
        out_shape=jax.ShapeDtypeStruct((n_splits, 8, 128), jnp.float32),
        grid_spec=pltpu.PrefetchScalarGridSpec(
            num_scalar_prefetch=0,
            grid=(n_splits, steps),
            in_specs=[tile_spec] * 7,
            out_specs=pl.BlockSpec((1, 8, 128), lambda c, k: (c, 0, 0)),
        ),
        compiler_params=pltpu.CompilerParams(
            dimension_semantics=("parallel", "arbitrary")),
    )(a1, b1, a2, b2, w1, w2, y)

    # Tiny epilogue: combine per-core vreg partials and normalize.
    return jnp.sum(partials) / n


def _reference(alpha1, beta1, alpha2, beta2, weights, y_true):
    from jax.scipy.special import gammaln
    y = jnp.clip(y_true, 1e-6, 1.0 - 1e-6)

    def beta_ll(a, b):
        log_beta = gammaln(a) + gammaln(b) - gammaln(a + b)
        return (a - 1.0) * jnp.log(y) + (b - 1.0) * jnp.log(1.0 - y) - log_beta

    ll1 = beta_ll(alpha1, beta1)
    ll2 = beta_ll(alpha2, beta2)
    w1 = weights[..., 0:1]
    w2 = weights[..., 1:2]
    loss = -jnp.log(w1 * jnp.exp(ll1) + w2 * jnp.exp(ll2))
    m1 = alpha1 / (alpha1 + beta1)
    m2 = alpha2 / (alpha2 + beta2)
    pred_mean = w1 * m1 + w2 * m2
    return jnp.mean(loss) + 0.2 * jnp.mean(jnp.abs(pred_mean - y))


if __name__ == "__main__":
    # Small shapes: B=2, D1=4, D2=8, D3=16 -> 1024 elements.
    key = jax.random.PRNGKey(0)
    k0, k1, k2, k3, k4, k5 = jax.random.split(key, 6)
    shape = (2, 4, 8, 16, 1)

    alpha1 = 0.5 + 4.5 * jax.random.uniform(k0, shape, dtype=jnp.float32)
    beta1 = 0.5 + 4.5 * jax.random.uniform(k1, shape, dtype=jnp.float32)
    alpha2 = 0.5 + 4.5 * jax.random.uniform(k2, shape, dtype=jnp.float32)
    beta2 = 0.5 + 4.5 * jax.random.uniform(k3, shape, dtype=jnp.float32)
    weights = jax.nn.softmax(
        jax.random.normal(k4, (2, 4, 8, 16, 2), dtype=jnp.float32), axis=-1)
    y_true = jax.random.uniform(k5, shape, dtype=jnp.float32,
                                minval=0.01, maxval=0.99)

    result = mixture_beta_nll_loss(alpha1, beta1, alpha2, beta2,
                                   weights, y_true)
    result = jax.block_until_ready(result)

    ref = _reference(alpha1, beta1, alpha2, beta2, weights, y_true)
    assert math.isfinite(float(result)), "kernel produced non-finite loss"
    assert jnp.allclose(result, ref, rtol=1e-3, atol=1e-3), (result, ref)

    print("KERNEL_OK")
</pallas_src>

<mosaic_0001>
module attributes {stable_mosaic.version = 11 : i64} {
  func.func @_mbeta_nll_kernel(%arg0: i32, %arg1: i32, %arg2: memref<8x128xf32, #tpu.memory_space<vmem>>, %arg3: memref<8x128xf32, #tpu.memory_space<vmem>>, %arg4: memref<8x128xf32, #tpu.memory_space<vmem>>, %arg5: memref<8x128xf32, #tpu.memory_space<vmem>>, %arg6: memref<8x128xf32, #tpu.memory_space<vmem>>, %arg7: memref<8x128xf32, #tpu.memory_space<vmem>>, %arg8: memref<8x128xf32, #tpu.memory_space<vmem>>, %arg9: memref<1x8x128xf32, #tpu.memory_space<vmem>>) attributes {dimension_semantics = [#tpu.dimension_semantics<parallel>, #tpu.dimension_semantics<arbitrary>], iteration_bounds = array<i64: 2, 1>, scalar_prefetch = 0 : i64, scratch_operands = 0 : i64, tpu.core_type = #tpu.core_type<tc>, window_params = [{transform_indices = @transform_0, window_bounds = array<i64: 8, 128>}, {transform_indices = @transform_1, window_bounds = array<i64: 8, 128>}, {transform_indices = @transform_2, window_bounds = array<i64: 8, 128>}, {transform_indices = @transform_3, window_bounds = array<i64: 8, 128>}, {transform_indices = @transform_4, window_bounds = array<i64: 8, 128>}, {transform_indices = @transform_5, window_bounds = array<i64: 8, 128>}, {transform_indices = @transform_6, window_bounds = array<i64: 8, 128>}, {transform_indices = @transform_7, window_bounds = array<i64: 1, 8, 128>}]} {
    %c0_i32 = arith.constant 0 : i32
    %0 = arith.cmpi eq, %arg1, %c0_i32 : i32
    %1 = arith.extui %0 : i1 to i32
    %c0_i32_0 = arith.constant 0 : i32
    %2 = arith.cmpi ne, %1, %c0_i32_0 : i32
    scf.if %2 {
      %cst_76 = arith.constant 0.000000e+00 : f32
      %248 = vector.broadcast %cst_76 : f32 to vector<1x8x128xf32>
      %c0_77 = arith.constant 0 : index
      %c0_78 = arith.constant 0 : index
      %c0_79 = arith.constant 0 : index
      %249 = vector.load %arg9[%c0_77, %c0_78, %c0_79] : memref<1x8x128xf32, #tpu.memory_space<vmem>>, vector<1x8x128xf32>
      tpu.vector_store %arg9[%c0_77, %c0_78, %c0_79], %248 {strides = array<i32>} : memref<1x8x128xf32, #tpu.memory_space<vmem>>, vector<1x8x128xf32>,
    } else {
    }
    %c0 = arith.constant 0 : index
    %c0_1 = arith.constant 0 : index
    %3 = vector.load %arg2[%c0, %c0_1] : memref<8x128xf32, #tpu.memory_space<vmem>>, vector<8x128xf32>
    %c0_2 = arith.constant 0 : index
    %c0_3 = arith.constant 0 : index
    %4 = vector.load %arg3[%c0_2, %c0_3] : memref<8x128xf32, #tpu.memory_space<vmem>>, vector<8x128xf32>
    %c0_4 = arith.constant 0 : index
    %c0_5 = arith.constant 0 : index
    %5 = vector.load %arg4[%c0_4, %c0_5] : memref<8x128xf32, #tpu.memory_space<vmem>>, vector<8x128xf32>
    %c0_6 = arith.constant 0 : index
    %c0_7 = arith.constant 0 : index
    %6 = vector.load %arg5[%c0_6, %c0_7] : memref<8x128xf32, #tpu.memory_space<vmem>>, vector<8x128xf32>
    %c0_8 = arith.constant 0 : index
    %c0_9 = arith.constant 0 : index
    %7 = vector.load %arg6[%c0_8, %c0_9] : memref<8x128xf32, #tpu.memory_space<vmem>>, vector<8x128xf32>
    %c0_10 = arith.constant 0 : index
    %c0_11 = arith.constant 0 : index
    %8 = vector.load %arg7[%c0_10, %c0_11] : memref<8x128xf32, #tpu.memory_space<vmem>>, vector<8x128xf32>
    %c0_12 = arith.constant 0 : index
    %c0_13 = arith.constant 0 : index
    %9 = vector.load %arg8[%c0_12, %c0_13] : memref<8x128xf32, #tpu.memory_space<vmem>>, vector<8x128xf32>
    %cst = arith.constant 9.99999997E-7 : f32
    %cst_14 = arith.constant 0.999998986 : f32
    %10 = vector.broadcast %cst : f32 to vector<8x128xf32>
    %11 = arith.maximumf %10, %9 : vector<8x128xf32>
    %12 = vector.broadcast %cst_14 : f32 to vector<8x128xf32>
    %13 = arith.minimumf %12, %11 : vector<8x128xf32>
    %14 = math.log %13 : vector<8x128xf32>
    %cst_15 = arith.constant 1.000000e+00 : f32
    %15 = vector.broadcast %cst_15 : f32 to vector<8x128xf32>
    %16 = arith.subf %15, %13 : vector<8x128xf32>
    %17 = math.log %16 : vector<8x128xf32>
    %18 = arith.addf %3, %4 : vector<8x128xf32>
    %19 = arith.addf %5, %6 : vector<8x128xf32>
    %cst_16 = arith.constant 1.000000e+00 : f32
    %20 = vector.broadcast %cst_16 : f32 to vector<8x128xf32>
    %21 = arith.subf %3, %20 : vector<8x128xf32>
    %22 = arith.mulf %21, %14 : vector<8x128xf32>
    %cst_17 = arith.constant 1.000000e+00 : f32
    %23 = vector.broadcast %cst_17 : f32 to vector<8x128xf32>
    %24 = arith.subf %4, %23 : vector<8x128xf32>
    %25 = arith.mulf %24, %17 : vector<8x128xf32>
    %26 = arith.addf %22, %25 : vector<8x128xf32>
    %cst_18 = arith.constant 6.000000e+00 : f32
    %27 = vector.broadcast %cst_18 : f32 to vector<8x128xf32>
    %28 = arith.addf %3, %27 : vector<8x128xf32>
    %cst_19 = arith.constant 6.000000e+00 : f32
    %29 = vector.broadcast %cst_19 : f32 to vector<8x128xf32>
    %30 = arith.addf %4, %29 : vector<8x128xf32>
    %cst_20 = arith.constant 6.000000e+00 : f32
    %31 = vector.broadcast %cst_20 : f32 to vector<8x128xf32>
    %32 = arith.addf %18, %31 : vector<8x128xf32>
    %cst_21 = arith.constant 1.000000e+00 : f32
    %33 = vector.broadcast %cst_21 : f32 to vector<8x128xf32>
    %34 = arith.addf %3, %33 : vector<8x128xf32>
    %35 = arith.mulf %3, %34 : vector<8x128xf32>
    %cst_22 = arith.constant 2.000000e+00 : f32
    %36 = vector.broadcast %cst_22 : f32 to vector<8x128xf32>
    %37 = arith.addf %3, %36 : vector<8x128xf32>
    %38 = arith.mulf %35, %37 : vector<8x128xf32>
    %cst_23 = arith.constant 3.000000e+00 : f32
    %39 = vector.broadcast %cst_23 : f32 to vector<8x128xf32>
    %40 = arith.addf %3, %39 : vector<8x128xf32>
    %41 = arith.mulf %38, %40 : vector<8x128xf32>
    %cst_24 = arith.constant 4.000000e+00 : f32
    %42 = vector.broadcast %cst_24 : f32 to vector<8x128xf32>
    %43 = arith.addf %3, %42 : vector<8x128xf32>
    %44 = arith.mulf %41, %43 : vector<8x128xf32>
    %cst_25 = arith.constant 5.000000e+00 : f32
    %45 = vector.broadcast %cst_25 : f32 to vector<8x128xf32>
    %46 = arith.addf %3, %45 : vector<8x128xf32>
    %47 = arith.mulf %44, %46 : vector<8x128xf32>
    %cst_26 = arith.constant 1.000000e+00 : f32
    %48 = vector.broadcast %cst_26 : f32 to vector<8x128xf32>
    %49 = arith.addf %4, %48 : vector<8x128xf32>
    %50 = arith.mulf %4, %49 : vector<8x128xf32>
    %cst_27 = arith.constant 2.000000e+00 : f32
    %51 = vector.broadcast %cst_27 : f32 to vector<8x128xf32>
    %52 = arith.addf %4, %51 : vector<8x128xf32>
    %53 = arith.mulf %50, %52 : vector<8x128xf32>
    %cst_28 = arith.constant 3.000000e+00 : f32
    %54 = vector.broadcast %cst_28 : f32 to vector<8x128xf32>
    %55 = arith.addf %4, %54 : vector<8x128xf32>
    %56 = arith.mulf %53, %55 : vector<8x128xf32>
    %cst_29 = arith.constant 4.000000e+00 : f32
    %57 = vector.broadcast %cst_29 : f32 to vector<8x128xf32>
    %58 = arith.addf %4, %57 : vector<8x128xf32>
    %59 = arith.mulf %56, %58 : vector<8x128xf32>
    %cst_30 = arith.constant 5.000000e+00 : f32
    %60 = vector.broadcast %cst_30 : f32 to vector<8x128xf32>
    %61 = arith.addf %4, %60 : vector<8x128xf32>
    %62 = arith.mulf %59, %61 : vector<8x128xf32>
    %cst_31 = arith.constant 1.000000e+00 : f32
    %63 = vector.broadcast %cst_31 : f32 to vector<8x128xf32>
    %64 = arith.addf %18, %63 : vector<8x128xf32>
    %65 = arith.mulf %18, %64 : vector<8x128xf32>
    %cst_32 = arith.constant 2.000000e+00 : f32
    %66 = vector.broadcast %cst_32 : f32 to vector<8x128xf32>
    %67 = arith.addf %18, %66 : vector<8x128xf32>
    %68 = arith.mulf %65, %67 : vector<8x128xf32>
    %cst_33 = arith.constant 3.000000e+00 : f32
    %69 = vector.broadcast %cst_33 : f32 to vector<8x128xf32>
    %70 = arith.addf %18, %69 : vector<8x128xf32>
    %71 = arith.mulf %68, %70 : vector<8x128xf32>
    %cst_34 = arith.constant 4.000000e+00 : f32
    %72 = vector.broadcast %cst_34 : f32 to vector<8x128xf32>
    %73 = arith.addf %18, %72 : vector<8x128xf32>
    %74 = arith.mulf %71, %73 : vector<8x128xf32>
    %cst_35 = arith.constant 5.000000e+00 : f32
    %75 = vector.broadcast %cst_35 : f32 to vector<8x128xf32>
    %76 = arith.addf %18, %75 : vector<8x128xf32>
    %77 = arith.mulf %74, %76 : vector<8x128xf32>
    %cst_36 = arith.constant 5.000000e-01 : f32
    %78 = vector.broadcast %cst_36 : f32 to vector<8x128xf32>
    %79 = arith.subf %28, %78 : vector<8x128xf32>
    %80 = math.log %28 : vector<8x128xf32>
    %81 = arith.mulf %79, %80 : vector<8x128xf32>
    %cst_37 = arith.constant 5.000000e-01 : f32
    %82 = vector.broadcast %cst_37 : f32 to vector<8x128xf32>
    %83 = arith.subf %30, %82 : vector<8x128xf32>
    %84 = math.log %30 : vector<8x128xf32>
    %85 = arith.mulf %83, %84 : vector<8x128xf32>
    %86 = arith.addf %81, %85 : vector<8x128xf32>
    %cst_38 = arith.constant 5.000000e-01 : f32
    %87 = vector.broadcast %cst_38 : f32 to vector<8x128xf32>
    %88 = arith.subf %32, %87 : vector<8x128xf32>
    %89 = math.log %32 : vector<8x128xf32>
    %90 = arith.mulf %88, %89 : vector<8x128xf32>
    %91 = arith.subf %86, %90 : vector<8x128xf32>
    %cst_39 = arith.constant -5.08106136 : f32
    %92 = vector.broadcast %cst_39 : f32 to vector<8x128xf32>
    %93 = arith.addf %91, %92 : vector<8x128xf32>
    %94 = arith.mulf %30, %32 : vector<8x128xf32>
    %95 = arith.mulf %28, %32 : vector<8x128xf32>
    %96 = arith.addf %94, %95 : vector<8x128xf32>
    %97 = arith.mulf %28, %30 : vector<8x128xf32>
    %98 = arith.subf %96, %97 : vector<8x128xf32>
    %cst_40 = arith.constant 1.200000e+01 : f32
    %99 = vector.broadcast %cst_40 : f32 to vector<8x128xf32>
    %100 = arith.mulf %99, %28 : vector<8x128xf32>
    %101 = arith.mulf %100, %30 : vector<8x128xf32>
    %102 = arith.mulf %101, %32 : vector<8x128xf32>
    %103 = tpu.reciprocal %102 {approx = true} : vector<8x128xf32> -> vector<8x128xf32>
    %104 = arith.mulf %98, %103 : vector<8x128xf32>
    %105 = arith.divf %47, %77 : vector<8x128xf32>
    %106 = arith.mulf %105, %62 : vector<8x128xf32>
    %107 = math.log %106 : vector<8x128xf32>
    %108 = arith.addf %93, %104 : vector<8x128xf32>
    %109 = arith.subf %108, %107 : vector<8x128xf32>
    %110 = arith.subf %26, %109 : vector<8x128xf32>
    %cst_41 = arith.constant 1.000000e+00 : f32
    %111 = vector.broadcast %cst_41 : f32 to vector<8x128xf32>
    %112 = arith.subf %5, %111 : vector<8x128xf32>
    %113 = arith.mulf %112, %14 : vector<8x128xf32>
    %cst_42 = arith.constant 1.000000e+00 : f32
    %114 = vector.broadcast %cst_42 : f32 to vector<8x128xf32>
    %115 = arith.subf %6, %114 : vector<8x128xf32>
    %116 = arith.mulf %115, %17 : vector<8x128xf32>
    %117 = arith.addf %113, %116 : vector<8x128xf32>
    %cst_43 = arith.constant 6.000000e+00 : f32
    %118 = vector.broadcast %cst_43 : f32 to vector<8x128xf32>
    %119 = arith.addf %5, %118 : vector<8x128xf32>
    %cst_44 = arith.constant 6.000000e+00 : f32
    %120 = vector.broadcast %cst_44 : f32 to vector<8x128xf32>
    %121 = arith.addf %6, %120 : vector<8x128xf32>
    %cst_45 = arith.constant 6.000000e+00 : f32
    %122 = vector.broadcast %cst_45 : f32 to vector<8x128xf32>
    %123 = arith.addf %19, %122 : vector<8x128xf32>
    %cst_46 = arith.constant 1.000000e+00 : f32
    %124 = vector.broadcast %cst_46 : f32 to vector<8x128xf32>
    %125 = arith.addf %5, %124 : vector<8x128xf32>
    %126 = arith.mulf %5, %125 : vector<8x128xf32>
    %cst_47 = arith.constant 2.000000e+00 : f32
    %127 = vector.broadcast %cst_47 : f32 to vector<8x128xf32>
    %128 = arith.addf %5, %127 : vector<8x128xf32>
    %129 = arith.mulf %126, %128 : vector<8x128xf32>
    %cst_48 = arith.constant 3.000000e+00 : f32
    %130 = vector.broadcast %cst_48 : f32 to vector<8x128xf32>
    %131 = arith.addf %5, %130 : vector<8x128xf32>
    %132 = arith.mulf %129, %131 : vector<8x128xf32>
    %cst_49 = arith.constant 4.000000e+00 : f32
    %133 = vector.broadcast %cst_49 : f32 to vector<8x128xf32>
    %134 = arith.addf %5, %133 : vector<8x128xf32>
    %135 = arith.mulf %132, %134 : vector<8x128xf32>
    %cst_50 = arith.constant 5.000000e+00 : f32
    %136 = vector.broadcast %cst_50 : f32 to vector<8x128xf32>
    %137 = arith.addf %5, %136 : vector<8x128xf32>
    %138 = arith.mulf %135, %137 : vector<8x128xf32>
    %cst_51 = arith.constant 1.000000e+00 : f32
    %139 = vector.broadcast %cst_51 : f32 to vector<8x128xf32>
    %140 = arith.addf %6, %139 : vector<8x128xf32>
    %141 = arith.mulf %6, %140 : vector<8x128xf32>
    %cst_52 = arith.constant 2.000000e+00 : f32
    %142 = vector.broadcast %cst_52 : f32 to vector<8x128xf32>
    %143 = arith.addf %6, %142 : vector<8x128xf32>
    %144 = arith.mulf %141, %143 : vector<8x128xf32>
    %cst_53 = arith.constant 3.000000e+00 : f32
    %145 = vector.broadcast %cst_53 : f32 to vector<8x128xf32>
    %146 = arith.addf %6, %145 : vector<8x128xf32>
    %147 = arith.mulf %144, %146 : vector<8x128xf32>
    %cst_54 = arith.constant 4.000000e+00 : f32
    %148 = vector.broadcast %cst_54 : f32 to vector<8x128xf32>
    %149 = arith.addf %6, %148 : vector<8x128xf32>
    %150 = arith.mulf %147, %149 : vector<8x128xf32>
    %cst_55 = arith.constant 5.000000e+00 : f32
    %151 = vector.broadcast %cst_55 : f32 to vector<8x128xf32>
    %152 = arith.addf %6, %151 : vector<8x128xf32>
    %153 = arith.mulf %150, %152 : vector<8x128xf32>
    %cst_56 = arith.constant 1.000000e+00 : f32
    %154 = vector.broadcast %cst_56 : f32 to vector<8x128xf32>
    %155 = arith.addf %19, %154 : vector<8x128xf32>
    %156 = arith.mulf %19, %155 : vector<8x128xf32>
    %cst_57 = arith.constant 2.000000e+00 : f32
    %157 = vector.broadcast %cst_57 : f32 to vector<8x128xf32>
    %158 = arith.addf %19, %157 : vector<8x128xf32>
    %159 = arith.mulf %156, %158 : vector<8x128xf32>
    %cst_58 = arith.constant 3.000000e+00 : f32
    %160 = vector.broadcast %cst_58 : f32 to vector<8x128xf32>
    %161 = arith.addf %19, %160 : vector<8x128xf32>
    %162 = arith.mulf %159, %161 : vector<8x128xf32>
    %cst_59 = arith.constant 4.000000e+00 : f32
    %163 = vector.broadcast %cst_59 : f32 to vector<8x128xf32>
    %164 = arith.addf %19, %163 : vector<8x128xf32>
    %165 = arith.mulf %162, %164 : vector<8x128xf32>
    %cst_60 = arith.constant 5.000000e+00 : f32
    %166 = vector.broadcast %cst_60 : f32 to vector<8x128xf32>
    %167 = arith.addf %19, %166 : vector<8x128xf32>
    %168 = arith.mulf %165, %167 : vector<8x128xf32>
    %cst_61 = arith.constant 5.000000e-01 : f32
    %169 = vector.broadcast %cst_61 : f32 to vector<8x128xf32>
    %170 = arith.subf %119, %169 : vector<8x128xf32>
    %171 = math.log %119 : vector<8x128xf32>
    %172 = arith.mulf %170, %171 : vector<8x128xf32>
    %cst_62 = arith.constant 5.000000e-01 : f32
    %173 = vector.broadcast %cst_62 : f32 to vector<8x128xf32>
    %174 = arith.subf %121, %173 : vector<8x128xf32>
    %175 = math.log %121 : vector<8x128xf32>
    %176 = arith.mulf %174, %175 : vector<8x128xf32>
    %177 = arith.addf %172, %176 : vector<8x128xf32>
    %cst_63 = arith.constant 5.000000e-01 : f32
    %178 = vector.broadcast %cst_63 : f32 to vector<8x128xf32>
    %179 = arith.subf %123, %178 : vector<8x128xf32>
    %180 = math.log %123 : vector<8x128xf32>
    %181 = arith.mulf %179, %180 : vector<8x128xf32>
    %182 = arith.subf %177, %181 : vector<8x128xf32>
    %cst_64 = arith.constant -5.08106136 : f32
    %183 = vector.broadcast %cst_64 : f32 to vector<8x128xf32>
    %184 = arith.addf %182, %183 : vector<8x128xf32>
    %185 = arith.mulf %121, %123 : vector<8x128xf32>
    %186 = arith.mulf %119, %123 : vector<8x128xf32>
    %187 = arith.addf %185, %186 : vector<8x128xf32>
    %188 = arith.mulf %119, %121 : vector<8x128xf32>
    %189 = arith.subf %187, %188 : vector<8x128xf32>
    %cst_65 = arith.constant 1.200000e+01 : f32
    %190 = vector.broadcast %cst_65 : f32 to vector<8x128xf32>
    %191 = arith.mulf %190, %119 : vector<8x128xf32>
    %192 = arith.mulf %191, %121 : vector<8x128xf32>
    %193 = arith.mulf %192, %123 : vector<8x128xf32>
    %194 = tpu.reciprocal %193 {approx = true} : vector<8x128xf32> -> vector<8x128xf32>
    %195 = arith.mulf %189, %194 : vector<8x128xf32>
    %196 = arith.divf %138, %168 : vector<8x128xf32>
    %197 = arith.mulf %196, %153 : vector<8x128xf32>
    %198 = math.log %197 : vector<8x128xf32>
    %199 = arith.addf %184, %195 : vector<8x128xf32>
    %200 = arith.subf %199, %198 : vector<8x128xf32>
    %201 = arith.subf %117, %200 : vector<8x128xf32>
    %202 = arith.maximumf %110, %201 : vector<8x128xf32>
    %203 = arith.minimumf %110, %201 : vector<8x128xf32>
    %204 = arith.cmpf oge, %110, %201 : vector<8x128xf32>
    %205 = arith.select %204, %7, %8 : vector<8x128xi1>, vector<8x128xf32>
    %206 = arith.select %204, %8, %7 : vector<8x128xi1>, vector<8x128xf32>
    %207 = arith.subf %203, %202 : vector<8x128xf32>
    %208 = math.exp %207 : vector<8x128xf32>
    %209 = arith.mulf %206, %208 : vector<8x128xf32>
    %210 = arith.addf %205, %209 : vector<8x128xf32>
    %211 = math.log %210 : vector<8x128xf32>
    %212 = arith.addf %202, %211 : vector<8x128xf32>
    %cst_66 = arith.constant 0.000000e+00 : f32
    %213 = vector.broadcast %cst_66 : f32 to vector<8x128xf32>
    %214 = arith.subf %213, %212 : vector<8x128xf32>
    %215 = arith.mulf %7, %3 : vector<8x128xf32>
    %216 = arith.mulf %215, %19 : vector<8x128xf32>
    %217 = arith.mulf %8, %5 : vector<8x128xf32>
    %218 = arith.mulf %217, %18 : vector<8x128xf32>
    %219 = arith.addf %216, %218 : vector<8x128xf32>
    %220 = arith.mulf %18, %19 : vector<8x128xf32>
    %221 = tpu.reciprocal %220 {approx = true} : vector<8x128xf32> -> vector<8x128xf32>
    %222 = arith.mulf %219, %221 : vector<8x128xf32>
    %223 = arith.subf %222, %13 : vector<8x128xf32>
    %224 = math.absf %223 : vector<8x128xf32>
    %cst_67 = arith.constant 2.000000e-01 : f32
    %225 = vector.broadcast %cst_67 : f32 to vector<8x128xf32>
    %226 = arith.mulf %225, %224 : vector<8x128xf32>
    %227 = arith.addf %214, %226 : vector<8x128xf32>
    %c1_i32 = arith.constant 1 : i32
    %228 = arith.muli %arg0, %c1_i32 : i32
    %229 = arith.addi %228, %arg1 : i32
    %c8_i32 = arith.constant 8 : i32
    %230 = arith.muli %229, %c8_i32 : i32
    %231 = tpu.iota {dimensions = array<i32: 0>} : vector<8x128xi32>
    %232 = tpu.iota {dimensions = array<i32: 1>} : vector<8x128xi32>
    %233 = vector.broadcast %230 : i32 to vector<8x128xi32>
    %234 = arith.addi %233, %231 : vector<8x128xi32>
    %c128_i32 = arith.constant 128 : i32
    %235 = vector.broadcast %c128_i32 : i32 to vector<8x128xi32>
    %236 = arith.muli %234, %235 : vector<8x128xi32>
    %237 = arith.addi %236, %232 : vector<8x128xi32>
    %c1024_i32 = arith.constant 1024 : i32
    %238 = vector.broadcast %c1024_i32 : i32 to vector<8x128xi32>
    %239 = arith.cmpi slt, %237, %238 : vector<8x128xi32>
    %cst_68 = arith.constant 0.000000e+00 : f32
    %240 = vector.broadcast %cst_68 : f32 to vector<8x128xf32>
    %241 = arith.select %239, %227, %240 : vector<8x128xi1>, vector<8x128xf32>
    %242 = vector.shape_cast %241 : vector<8x128xf32> to vector<1x8x128xf32>
    %cst_69 = arith.constant dense<0.000000e+00> : vector<8x128xf32>
    %243 = vector.multi_reduction <add>, %242, %cst_69 [0] : vector<1x8x128xf32> to vector<8x128xf32>
    %c0_70 = arith.constant 0 : index
    %c0_71 = arith.constant 0 : index
    %c0_72 = arith.constant 0 : index
    %244 = vector.load %arg9[%c0_70, %c0_71, %c0_72] : memref<1x8x128xf32, #tpu.memory_space<vmem>>, vector<1x8x128xf32>
    %245 = vector.shape_cast %243 : vector<8x128xf32> to vector<1x8x128xf32>
    %246 = arith.addf %244, %245 : vector<1x8x128xf32>
    %c0_73 = arith.constant 0 : index
    %c0_74 = arith.constant 0 : index
    %c0_75 = arith.constant 0 : index
    %247 = vector.load %arg9[%c0_73, %c0_74, %c0_75] : memref<1x8x128xf32, #tpu.memory_space<vmem>>, vector<1x8x128xf32>
    tpu.vector_store %arg9[%c0_73, %c0_74, %c0_75], %246 {strides = array<i32>} : memref<1x8x128xf32, #tpu.memory_space<vmem>>, vector<1x8x128xf32>,
    return
  }
  func.func @transform_0(%arg0: i32, %arg1: i32) -> (i32, i32) {
    %c1_i32 = arith.constant 1 : i32
    %0 = arith.muli %arg0, %c1_i32 : i32
    %1 = arith.addi %0, %arg1 : i32
    %c0_i32 = arith.constant 0 : i32
    %c0_i32_0 = arith.constant 0 : i32
    return %1, %c0_i32 : i32, i32
  }
  func.func @transform_1(%arg0: i32, %arg1: i32) -> (i32, i32) {
    %c1_i32 = arith.constant 1 : i32
    %0 = arith.muli %arg0, %c1_i32 : i32
    %1 = arith.addi %0, %arg1 : i32
    %c0_i32 = arith.constant 0 : i32
    %c0_i32_0 = arith.constant 0 : i32
    return %1, %c0_i32 : i32, i32
  }
  func.func @transform_2(%arg0: i32, %arg1: i32) -> (i32, i32) {
    %c1_i32 = arith.constant 1 : i32
    %0 = arith.muli %arg0, %c1_i32 : i32
    %1 = arith.addi %0, %arg1 : i32
    %c0_i32 = arith.constant 0 : i32
    %c0_i32_0 = arith.constant 0 : i32
    return %1, %c0_i32 : i32, i32
  }
  func.func @transform_3(%arg0: i32, %arg1: i32) -> (i32, i32) {
    %c1_i32 = arith.constant 1 : i32
    %0 = arith.muli %arg0, %c1_i32 : i32
    %1 = arith.addi %0, %arg1 : i32
    %c0_i32 = arith.constant 0 : i32
    %c0_i32_0 = arith.constant 0 : i32
    return %1, %c0_i32 : i32, i32
  }
  func.func @transform_4(%arg0: i32, %arg1: i32) -> (i32, i32) {
    %c1_i32 = arith.constant 1 : i32
    %0 = arith.muli %arg0, %c1_i32 : i32
    %1 = arith.addi %0, %arg1 : i32
    %c0_i32 = arith.constant 0 : i32
    %c0_i32_0 = arith.constant 0 : i32
    return %1, %c0_i32 : i32, i32
  }
  func.func @transform_5(%arg0: i32, %arg1: i32) -> (i32, i32) {
    %c1_i32 = arith.constant 1 : i32
    %0 = arith.muli %arg0, %c1_i32 : i32
    %1 = arith.addi %0, %arg1 : i32
    %c0_i32 = arith.constant 0 : i32
    %c0_i32_0 = arith.constant 0 : i32
    return %1, %c0_i32 : i32, i32
  }
  func.func @transform_6(%arg0: i32, %arg1: i32) -> (i32, i32) {
    %c1_i32 = arith.constant 1 : i32
    %0 = arith.muli %arg0, %c1_i32 : i32
    %1 = arith.addi %0, %arg1 : i32
    %c0_i32 = arith.constant 0 : i32
    %c0_i32_0 = arith.constant 0 : i32
    return %1, %c0_i32 : i32, i32
  }
  func.func @transform_7(%arg0: i32, %arg1: i32) -> (i32, i32, i32) {
    %c0_i32 = arith.constant 0 : i32
    %c0_i32_0 = arith.constant 0 : i32
    %c0_i32_1 = arith.constant 0 : i32
    return %arg0, %c0_i32, %c0_i32_0 : i32, i32, i32
  }
}

</mosaic_0001>

<llo_original>
// kernel: tpu_custom_call.1
$region0: #{tpu_custom_call.1}
  #allocation0 [shape = 'u32[]', space=smem, size = 0x4, offset = 0x4, fixed_abs, tag = 'smem constant byte address 0x4 - core index']
  #allocation1 [shape = 'u32[144,128]{1,0:T(1,128)}', space=vmem, size = 0x12000, scoped, tag = 'internal scratch']
  %s0 = inlined_call_operand.hbm [shape: f32[16,128], index: 0, kind: input, shape index: {}]
  %s1 = inlined_call_operand.hbm [shape: f32[16,128], index: 1, kind: input, shape index: {}]
  %s2 = inlined_call_operand.hbm [shape: f32[16,128], index: 2, kind: input, shape index: {}]
  %s3 = inlined_call_operand.hbm [shape: f32[16,128], index: 3, kind: input, shape index: {}]
  %s4 = inlined_call_operand.hbm [shape: f32[16,128], index: 4, kind: input, shape index: {}]
  %s5 = inlined_call_operand.vmem [shape: f32[16,128], index: 5, kind: input, shape index: {}]
  %s6 = inlined_call_operand.hbm [shape: f32[16,128], index: 6, kind: input, shape index: {}]
  %s7 = inlined_call_operand.hbm [shape: f32[2,8,128], index: 7, kind: output, shape index: {}]
  %s8 = sld [smem:[#allocation0]]
  $region89: #{tpu_custom_call.1} parent=0
    _
  %s10 = ssub.s32 1, %s8
  %s11 = scalar_select 0, %s10, %s8
  $region1: #{tpu_custom_call.1} parent=0
    #allocation2 [shape = 'u8[8192]{0}', space=vmem, size = 0x2000, scoped, tag = 'input window, operand 0']
    #allocation3 [shape = 's32[2]{0}', space=sflag, size = 0x8, scoped, tag = 'scoped memory for tpu_custom_call.1']
    #allocation4 [shape = 's32[2]{0}', space=sflag, size = 0x8, scoped, tag = 'scoped memory for tpu_custom_call.1']
    #allocation5 [shape = 'u8[8192]{0}', space=vmem, size = 0x2000, scoped, tag = 'input window, operand 1']
    #allocation6 [shape = 's32[2]{0}', space=sflag, size = 0x8, scoped, tag = 'scoped memory for tpu_custom_call.1']
    #allocation7 [shape = 'u8[8192]{0}', space=vmem, size = 0x2000, scoped, tag = 'input window, operand 2']
    #allocation8 [shape = 'u8[8192]{0}', space=vmem, size = 0x2000, scoped, tag = 'input window, operand 3']
    #allocation9 [shape = 's32[2]{0}', space=sflag, size = 0x8, scoped, tag = 'scoped memory for tpu_custom_call.1']
    #allocation10 [shape = 'u8[8192]{0}', space=vmem, size = 0x2000, scoped, tag = 'input window, operand 4']
    #allocation11 [shape = 'u8[8192]{0}', space=vmem, size = 0x2000, scoped, tag = 'input window, operand 6']
    #allocation12 [shape = 's32[2]{0}', space=sflag, size = 0x8, scoped, tag = 'scoped memory for tpu_custom_call.1']
    #allocation13 [shape = 'u8[8192]{0}', space=vmem, size = 0x2000, scoped, tag = 'output window, operand 0']
    %12 = vsyncpa [#allocation3], 0
    %s13 = scalar_lea.sflag [#allocation3], 1
    %14 = vsyncpa %s13, 0
    %15 = vsyncpa [#allocation6], 0
    %s16 = scalar_lea.sflag [#allocation6], 1
    %17 = vsyncpa %s16, 0
    %18 = vsyncpa [#allocation9], 0
    %s19 = scalar_lea.sflag [#allocation9], 1
    %20 = vsyncpa %s19, 0
    %21 = vsyncpa [#allocation12], 0
    %s22 = scalar_lea.sflag [#allocation12], 1
    %23 = vsyncpa %s22, 0
    %24 = vsyncpa [#allocation4], 0
    %s25 = scalar_lea.sflag [#allocation4], 1
    %26 = vsyncpa %s25, 0
    loop: start=0, step=1, limit=4
    $region2: #{tpu_custom_call.1} parent=1 // loop_pre_header
      _
    $region3: #{tpu_custom_call.1} parent=1 // loop_header
      %s28 = sphi 0, %s32
      %p29 = scmp.ge.s32.totalorder %s28, 4
      %s35 = sphi 0, %s47
      %s36 = sphi 0, %s43
      %s37 = sphi 0, %s35
      %s38 = sphi 0, %s36
      %s39 = sphi 0, %s37
      %s40 = sphi 0, %s38
      %s52 = sphi 0, %s54
      %s55 = sphi 0, %s52
      %s56 = sphi 0, %s55
      %s72 = sphi 0, %s56
      %s80 = sphi 0, %s82
      %s83 = sphi 0, %s80
      %s84 = sphi 0, %s83
      %s100 = sphi 0, %s84
      %s108 = sphi 0, %s110
      %s111 = sphi 0, %s108
      %s112 = sphi 0, %s111
      %s128 = sphi 0, %s112
      %s136 = sphi 0, %s138
      %s139 = sphi 0, %s136
      %s140 = sphi 0, %s139
      %s156 = sphi 0, %s140
      %s164 = sphi 0, %s166
      %s167 = sphi 0, %s164
      %s168 = sphi 0, %s167
      %s184 = sphi 0, %s168
      %s192 = sphi 0, %s194
      %s195 = sphi 0, %s192
      %s196 = sphi 0, %s195
      %s212 = sphi 0, %s196
      %s220 = sphi 0, %s222
      %s223 = sphi 0, %s220
      %s224 = sphi 0, %s223
      %s240 = sphi 0, %s224
      %s246 = sphi 0, %s248
      %s249 = sphi 0, %s246
      %s250 = sphi 0, %s249
      %s266 = sphi 0, %s250
    $region4: #{tpu_custom_call.1} parent=1 // loop_header_branch
      %31 = sbr.rel (%p29) target = $region8
    $region5: #{tpu_custom_call.1} parent=1 // loop_body
      %s33 = ssub.s32 %s28, 1
      %s34 = ssub.s32 %s28, 2
      %s41 = sadd.s32 1, %s36
      %p42 = scmp.ge.s32.totalorder %s41, 1
      %s43 = scalar_select %p42, 0, %s41
      %s44 = sadd.s32 1, %s35
      %s45 = scalar_select %p42, %s44, %s35
      %p46 = scmp.ge.s32.totalorder %s45, 2
      %s47 = scalar_select %p46, 0, %s45
      %s48 = sadd.s32 %s35, %s36
      %s49 = sadd.s32 %s47, %s43
      %s50 = ssub.s32 %s48, %s49
      %p51 = scmp.eq.s32.totalorder %s50, 0
      %s53 = sadd.s32 %s52, 1
      %s54 = scalar_select %p51, %s52, %s53
      %p57 = pneg %p51
      %p58 = scmp.eq.s32.totalorder %s28, 1
      %p59 = por %p57, %p58
      %p60 = scmp.ne.s32.totalorder %s52, %s55
      %p61 = scmp.eq.s32.totalorder %s28, 0
      %p62 = por %p60, %p61
      %p63 = scmp.ne.s32.totalorder %s52, %s55
      %p64 = scmp.eq.s32.totalorder %s33, 1
      %p65 = por %p63, %p64
      %p66 = scmp.ne.s32.totalorder %s55, %s56
      %p67 = scmp.eq.s32.totalorder %s33, 0
      %p68 = por %p66, %p67
      %p69 = scmp.ne.s32.totalorder %s55, %s56
      %p70 = scmp.eq.s32.totalorder %s34, 1
      %p71 = por %p69, %p70
      %p73 = scmp.ne.s32.totalorder %s56, %s72
      %p74 = scmp.eq.s32.totalorder %s34, 0
      %p75 = por %p73, %p74
      %s76 = sadd.s32 %s35, %s36
      %s77 = sadd.s32 %s47, %s43
      %s78 = ssub.s32 %s76, %s77
      %p79 = scmp.eq.s32.totalorder %s78, 0
      %s81 = sadd.s32 %s80, 1
      %s82 = scalar_select %p79, %s80, %s81
      %p85 = pneg %p79
      %p86 = scmp.eq.s32.totalorder %s28, 1
      %p87 = por %p85, %p86
      %p88 = scmp.ne.s32.totalorder %s80, %s83
      %p89 = scmp.eq.s32.totalorder %s28, 0
      %p90 = por %p88, %p89
      %p91 = scmp.ne.s32.totalorder %s80, %s83
      %p92 = scmp.eq.s32.totalorder %s33, 1
      %p93 = por %p91, %p92
      %p94 = scmp.ne.s32.totalorder %s83, %s84
      %p95 = scmp.eq.s32.totalorder %s33, 0
      %p96 = por %p94, %p95
      %p97 = scmp.ne.s32.totalorder %s83, %s84
      %p98 = scmp.eq.s32.totalorder %s34, 1
      %p99 = por %p97, %p98
      %p101 = scmp.ne.s32.totalorder %s84, %s100
      %p102 = scmp.eq.s32.totalorder %s34, 0
      %p103 = por %p101, %p102
      %s104 = sadd.s32 %s35, %s36
      %s105 = sadd.s32 %s47, %s43
      %s106 = ssub.s32 %s104, %s105
      %p107 = scmp.eq.s32.totalorder %s106, 0
      %s109 = sadd.s32 %s108, 1
      %s110 = scalar_select %p107, %s108, %s109
      %p113 = pneg %p107
      %p114 = scmp.eq.s32.totalorder %s28, 1
      %p115 = por %p113, %p114
      %p116 = scmp.ne.s32.totalorder %s108, %s111
      %p117 = scmp.eq.s32.totalorder %s28, 0
      %p118 = por %p116, %p117
      %p119 = scmp.ne.s32.totalorder %s108, %s111
      %p120 = scmp.eq.s32.totalorder %s33, 1
      %p121 = por %p119, %p120
      %p122 = scmp.ne.s32.totalorder %s111, %s112
      %p123 = scmp.eq.s32.totalorder %s33, 0
      %p124 = por %p122, %p123
      %p125 = scmp.ne.s32.totalorder %s111, %s112
      %p126 = scmp.eq.s32.totalorder %s34, 1
      %p127 = por %p125, %p126
      %p129 = scmp.ne.s32.totalorder %s112, %s128
      %p130 = scmp.eq.s32.totalorder %s34, 0
      %p131 = por %p129, %p130
      %s132 = sadd.s32 %s35, %s36
      %s133 = sadd.s32 %s47, %s43
      %s134 = ssub.s32 %s132, %s133
      %p135 = scmp.eq.s32.totalorder %s134, 0
      %s137 = sadd.s32 %s136, 1
      %s138 = scalar_select %p135, %s136, %s137
      %p141 = pneg %p135
      %p142 = scmp.eq.s32.totalorder %s28, 1
      %p143 = por %p141, %p142
      %p144 = scmp.ne.s32.totalorder %s136, %s139
      %p145 = scmp.eq.s32.totalorder %s28, 0
      %p146 = por %p144, %p145
      %p147 = scmp.ne.s32.totalorder %s136, %s139
      %p148 = scmp.eq.s32.totalorder %s33, 1
      %p149 = por %p147, %p148
      %p150 = scmp.ne.s32.totalorder %s139, %s140
      %p151 = scmp.eq.s32.totalorder %s33, 0
      %p152 = por %p150, %p151
      %p153 = scmp.ne.s32.totalorder %s139, %s140
      %p154 = scmp.eq.s32.totalorder %s34, 1
      %p155 = por %p153, %p154
      %p157 = scmp.ne.s32.totalorder %s140, %s156
      %p158 = scmp.eq.s32.totalorder %s34, 0
      %p159 = por %p157, %p158
      %s160 = sadd.s32 %s35, %s36
      %s161 = sadd.s32 %s47, %s43
      %s162 = ssub.s32 %s160, %s161
      %p163 = scmp.eq.s32.totalorder %s162, 0
      %s165 = sadd.s32 %s164, 1
      %s166 = scalar_select %p163, %s164, %s165
      %p169 = pneg %p163
      %p170 = scmp.eq.s32.totalorder %s28, 1
      %p171 = por %p169, %p170
      %p172 = scmp.ne.s32.totalorder %s164, %s167
      %p173 = scmp.eq.s32.totalorder %s28, 0
      %p174 = por %p172, %p173
      %p175 = scmp.ne.s32.totalorder %s164, %s167
      %p176 = scmp.eq.s32.totalorder %s33, 1
      %p177 = por %p175, %p176
      %p178 = scmp.ne.s32.totalorder %s167, %s168
      %p179 = scmp.eq.s32.totalorder %s33, 0
      %p180 = por %p178, %p179
      %p181 = scmp.ne.s32.totalorder %s167, %s168
      %p182 = scmp.eq.s32.totalorder %s34, 1
      %p183 = por %p181, %p182
      %p185 = scmp.ne.s32.totalorder %s168, %s184
      %p186 = scmp.eq.s32.totalorder %s34, 0
      %p187 = por %p185, %p186
      %s188 = sadd.s32 %s35, %s36
      %s189 = sadd.s32 %s47, %s43
      %s190 = ssub.s32 %s188, %s189
      %p191 = scmp.eq.s32.totalorder %s190, 0
      %s193 = sadd.s32 %s192, 1
      %s194 = scalar_select %p191, %s192, %s193
      %p197 = pneg %p191
      %p198 = scmp.eq.s32.totalorder %s28, 1
      %p199 = por %p197, %p198
      %p200 = scmp.ne.s32.totalorder %s192, %s195
      %p201 = scmp.eq.s32.totalorder %s28, 0
      %p202 = por %p200, %p201
      %p203 = scmp.ne.s32.totalorder %s192, %s195
      %p204 = scmp.eq.s32.totalorder %s33, 1
      %p205 = por %p203, %p204
      %p206 = scmp.ne.s32.totalorder %s195, %s196
      %p207 = scmp.eq.s32.totalorder %s33, 0
      %p208 = por %p206, %p207
      %p209 = scmp.ne.s32.totalorder %s195, %s196
      %p210 = scmp.eq.s32.totalorder %s34, 1
      %p211 = por %p209, %p210
      %p213 = scmp.ne.s32.totalorder %s196, %s212
      %p214 = scmp.eq.s32.totalorder %s34, 0
      %p215 = por %p213, %p214
      %s216 = sadd.s32 %s35, %s36
      %s217 = sadd.s32 %s47, %s43
      %s218 = ssub.s32 %s216, %s217
      %p219 = scmp.eq.s32.totalorder %s218, 0
      %s221 = sadd.s32 %s220, 1
      %s222 = scalar_select %p219, %s220, %s221
      %p225 = pneg %p219
      %p226 = scmp.eq.s32.totalorder %s28, 1
      %p227 = por %p225, %p226
      %p228 = scmp.ne.s32.totalorder %s220, %s223
      %p229 = scmp.eq.s32.totalorder %s28, 0
      %p230 = por %p228, %p229
      %p231 = scmp.ne.s32.totalorder %s220, %s223
      %p232 = scmp.eq.s32.totalorder %s33, 1
      %p233 = por %p231, %p232
      %p234 = scmp.ne.s32.totalorder %s223, %s224
      %p235 = scmp.eq.s32.totalorder %s33, 0
      %p236 = por %p234, %p235
      %p237 = scmp.ne.s32.totalorder %s223, %s224
      %p238 = scmp.eq.s32.totalorder %s34, 1
      %p239 = por %p237, %p238
      %p241 = scmp.ne.s32.totalorder %s224, %s240
      %p242 = scmp.eq.s32.totalorder %s34, 0
      %p243 = por %p241, %p242
      %s244 = ssub.s32 %s35, %s47
      %p245 = scmp.eq.s32.totalorder %s244, 0
      %s247 = sadd.s32 %s246, 1
      %s248 = scalar_select %p245, %s246, %s247
      %p251 = pneg %p245
      %p252 = scmp.eq.s32.totalorder %s28, 1
      %p253 = por %p251, %p252
      %p254 = scmp.ne.s32.totalorder %s246, %s249
      %p255 = scmp.eq.s32.totalorder %s28, 0
      %p256 = por %p254, %p255
      %p257 = scmp.ne.s32.totalorder %s246, %s249
      %p258 = scmp.eq.s32.totalorder %s33, 1
      %p259 = por %p257, %p258
      %p260 = scmp.ne.s32.totalorder %s249, %s250
      %p261 = scmp.eq.s32.totalorder %s33, 0
      %p262 = por %p260, %p261
      %p263 = scmp.ne.s32.totalorder %s249, %s250
      %p264 = scmp.eq.s32.totalorder %s34, 1
      %p265 = por %p263, %p264
      %p267 = scmp.ne.s32.totalorder %s250, %s266
      %p268 = scmp.eq.s32.totalorder %s34, 0
      %p269 = por %p267, %p268
      %p270 = scmp.le.s32.totalorder 1, %s28
      %p271 = scmp.lt.s32.totalorder %s28, 3
      %p272 = pnand %p270, %p271
      %p273 = pneg %p272
      // Predicated region
      $region9: #{tpu_custom_call.1} parent=5 // pred_check
        _
      $region10: #{tpu_custom_call.1} parent=5 // pred_check_branch
        %275 = sbr.rel (%p272) target = $region12
      $region11: #{tpu_custom_call.1} parent=5 // pred_region
        %s276 = ssub.s32 %s28, 1
      $region12: #{tpu_custom_call.1} parent=5 // pred_fallthru
        _
      %p277 = scmp.lt.s32.totalorder %s28, 2
      // Predicated region
      $region13: #{tpu_custom_call.1} parent=5 // pred_check
        %p278 = pneg %p277
      $region14: #{tpu_custom_call.1} parent=5 // pred_check_branch
        %280 = sbr.rel (%p278) target = $region16
      $region15: #{tpu_custom_call.1} parent=5 // pred_region
        // Predicated region
        $region17: #{tpu_custom_call.1} parent=15 // pred_check
          %p281 = pneg %p62
        $region18: #{tpu_custom_call.1} parent=15 // pred_check_branch
          %283 = sbr.rel (%p281) target = $region20
        $region19: #{tpu_custom_call.1} parent=15 // pred_region
          %s284 = sand.u32 %s52, 1
          %s285 = scalar_lea.sflag [#allocation3], %s284
          %s286 = sand.u32 %s52, 1
          %s287 = smul.addr %s286, 8
          %s288 = scalar_lea.vmem [#allocation2], %s287
          %s289 = sadd.s32 %s35, %s36
          %s291 = ssub.s32 128, 128
          %292 = vsyncadd %s285, %s291
          %s293 = smul.addr %s289, 128
          %s294 = scalar_lea.hbm %s0, %s293
          %s296 = sshll.u32 %s288, 4
          %s297 = int_to_ptr.vmem [resolvable:$true] %s296
          %299 = dma.hbm_to_vmem [thread:$0]  %s294, 128, %s297, %s285
        $region20: #{tpu_custom_call.1} parent=15 // pred_fallthru
          _
        // Predicated region
        $region21: #{tpu_custom_call.1} parent=15 // pred_check
          %p300 = pneg %p90
        $region22: #{tpu_custom_call.1} parent=15 // pred_check_branch
          %302 = sbr.rel (%p300) target = $region24
        $region23: #{tpu_custom_call.1} parent=15 // pred_region
          %s303 = sand.u32 %s28, 1
          %s304 = scalar_lea.sflag [#allocation6], %s303
          %s305 = sand.u32 %s80, 1
          %s306 = smul.addr %s305, 8
          %s307 = scalar_lea.vmem [#allocation5], %s306
          %s308 = sadd.s32 %s35, %s36
          %s310 = ssub.s32 128, 128
          %311 = vsyncadd %s304, %s310
          %s312 = smul.addr %s308, 128
          %s313 = scalar_lea.hbm %s1, %s312
          %s315 = sshll.u32 %s307, 4
          %s316 = int_to_ptr.vmem [resolvable:$true] %s315
          %318 = dma.hbm_to_vmem [thread:$0]  %s313, 128, %s316, %s304
        $region24: #{tpu_custom_call.1} parent=15 // pred_fallthru
          _
        // Predicated region
        $region25: #{tpu_custom_call.1} parent=15 // pred_check
          %p319 = pneg %p118
        $region26: #{tpu_custom_call.1} parent=15 // pred_check_branch
          %321 = sbr.rel (%p319) target = $region28
        $region27: #{tpu_custom_call.1} parent=15 // pred_region
          %s322 = sand.u32 %s28, 1
          %s323 = scalar_lea.sflag [#allocation6], %s322
          %s324 = sand.u32 %s108, 1
          %s325 = smul.addr %s324, 8
          %s326 = scalar_lea.vmem [#allocation7], %s325
          %s327 = sadd.s32 %s35, %s36
          %s329 = ssub.s32 128, 128
          %330 = vsyncadd %s323, %s329
          %s331 = smul.addr %s327, 128
          %s332 = scalar_lea.hbm %s2, %s331
          %s334 = sshll.u32 %s326, 4
          %s335 = int_to_ptr.vmem [resolvable:$true] %s334
          %337 = dma.hbm_to_vmem [thread:$0]  %s332, 128, %s335, %s323
        $region28: #{tpu_custom_call.1} parent=15 // pred_fallthru
          _
        // Predicated region
        $region29: #{tpu_custom_call.1} parent=15 // pred_check
          %p338 = pneg %p146
        $region30: #{tpu_custom_call.1} parent=15 // pred_check_branch
          %340 = sbr.rel (%p338) target = $region32
        $region31: #{tpu_custom_call.1} parent=15 // pred_region
          %s341 = sand.u32 %s28, 1
          %s342 = scalar_lea.sflag [#allocation9], %s341
          %s343 = sand.u32 %s136, 1
          %s344 = smul.addr %s343, 8
          %s345 = scalar_lea.vmem [#allocation8], %s344
          %s346 = sadd.s32 %s35, %s36
          %s348 = ssub.s32 128, 128
          %349 = vsyncadd %s342, %s348
          %s350 = smul.addr %s346, 128
          %s351 = scalar_lea.hbm %s3, %s350
          %s353 = sshll.u32 %s345, 4
          %s354 = int_to_ptr.vmem [resolvable:$true] %s353
          %356 = dma.hbm_to_vmem [thread:$0]  %s351, 128, %s354, %s342
        $region32: #{tpu_custom_call.1} parent=15 // pred_fallthru
          _
        // Predicated region
        $region33: #{tpu_custom_call.1} parent=15 // pred_check
          %p357 = pneg %p174
        $region34: #{tpu_custom_call.1} parent=15 // pred_check_branch
          %359 = sbr.rel (%p357) target = $region36
        $region35: #{tpu_custom_call.1} parent=15 // pred_region
          %s360 = sand.u32 %s28, 1
          %s361 = scalar_lea.sflag [#allocation9], %s360
          %s362 = sand.u32 %s164, 1
          %s363 = smul.addr %s362, 8
          %s364 = scalar_lea.vmem [#allocation10], %s363
          %s365 = sadd.s32 %s35, %s36
          %s367 = ssub.s32 128, 128
          %368 = vsyncadd %s361, %s367
          %s369 = smul.addr %s365, 128
          %s370 = scalar_lea.hbm %s4, %s369
          %s372 = sshll.u32 %s364, 4
          %s373 = int_to_ptr.vmem [resolvable:$true] %s372
          %375 = dma.hbm_to_vmem [thread:$0]  %s370, 128, %s373, %s361
        $region36: #{tpu_custom_call.1} parent=15 // pred_fallthru
          _
        // Predicated region
        $region37: #{tpu_custom_call.1} parent=15 // pred_check
          %p376 = pneg %p202
        $region38: #{tpu_custom_call.1} parent=15 // pred_check_branch
          %378 = sbr.rel (%p376) target = $region40
        $region39: #{tpu_custom_call.1} parent=15 // pred_region
          %s379 = sadd.s32 %s35, %s36
          %p380 = scmp.lt.s32.totalorder %s379, 1
          %s381 = scalar_select %p380, %s379, 1
          %s382 = smul.addr %s381, 8
          %s383 = scalar_lea.vmem %s5, %s382
          %s384 = sadd.s32 %s35, %s36
        $region40: #{tpu_custom_call.1} parent=15 // pred_fallthru
          _
        // Predicated region
        $region41: #{tpu_custom_call.1} parent=15 // pred_check
          %p385 = pneg %p230
        $region42: #{tpu_custom_call.1} parent=15 // pred_check_branch
          %387 = sbr.rel (%p385) target = $region44
        $region43: #{tpu_custom_call.1} parent=15 // pred_region
          %s388 = sand.u32 %s220, 1
          %s389 = scalar_lea.sflag [#allocation12], %s388
          %s390 = sand.u32 %s220, 1
          %s391 = smul.addr %s390, 8
          %s392 = scalar_lea.vmem [#allocation11], %s391
          %s393 = sadd.s32 %s35, %s36
          %s395 = ssub.s32 128, 128
          %396 = vsyncadd %s389, %s395
          %s397 = smul.addr %s393, 128
          %s398 = scalar_lea.hbm %s6, %s397
          %s400 = sshll.u32 %s392, 4
          %s401 = int_to_ptr.vmem [resolvable:$true] %s400
          %403 = dma.hbm_to_vmem [thread:$0]  %s398, 128, %s401, %s389
        $region44: #{tpu_custom_call.1} parent=15 // pred_fallthru
          _
      $region16: #{tpu_custom_call.1} parent=5 // pred_fallthru
        _
      %p404 = scmp.le.s32.totalorder 1, %s28
      %p405 = scmp.lt.s32.totalorder %s28, 3
      %p406 = pnand %p404, %p405
      %p407 = pneg %p406
      // Predicated region
      $region45: #{tpu_custom_call.1} parent=5 // pred_check
        _
      $region46: #{tpu_custom_call.1} parent=5 // pred_check_branch
        %409 = sbr.rel (%p406) target = $region48
      $region47: #{tpu_custom_call.1} parent=5 // pred_region
        %s410 = ssub.s32 %s28, 1
        %s411 = sand.u32 %s55, 1
        %s412 = scalar_lea.sflag [#allocation3], %s411
        %s413 = sand.u32 %s55, 1
        %s414 = smul.addr %s413, 8
        %s415 = scalar_lea.vmem [#allocation2], %s414
        // Predicated region
        $region49: #{tpu_custom_call.1} parent=47 // pred_check
          %p416 = pneg %p68
        $region50: #{tpu_custom_call.1} parent=47 // pred_check_branch
          %418 = sbr.rel (%p416) target = $region52
        $region51: #{tpu_custom_call.1} parent=47 // pred_region
          %419 = dma.done %s412, 128
        $region52: #{tpu_custom_call.1} parent=47 // pred_fallthru
          _
        %s420 = sand.u32 %s33, 1
        %s421 = scalar_lea.sflag [#allocation6], %s420
        %s422 = sand.u32 %s83, 1
        %s423 = smul.addr %s422, 8
        %s424 = scalar_lea.vmem [#allocation5], %s423
        // Predicated region
        $region53: #{tpu_custom_call.1} parent=47 // pred_check
          %p425 = pneg %p96
        $region54: #{tpu_custom_call.1} parent=47 // pred_check_branch
          %427 = sbr.rel (%p425) target = $region56
        $region55: #{tpu_custom_call.1} parent=47 // pred_region
          %428 = dma.done %s421, 128
        $region56: #{tpu_custom_call.1} parent=47 // pred_fallthru
          _
        %s429 = sand.u32 %s33, 1
        %s430 = scalar_lea.sflag [#allocation6], %s429
        %s431 = sand.u32 %s111, 1
        %s432 = smul.addr %s431, 8
        %s433 = scalar_lea.vmem [#allocation7], %s432
        // Predicated region
        $region57: #{tpu_custom_call.1} parent=47 // pred_check
          %p434 = pneg %p124
        $region58: #{tpu_custom_call.1} parent=47 // pred_check_branch
          %436 = sbr.rel (%p434) target = $region60
        $region59: #{tpu_custom_call.1} parent=47 // pred_region
          %437 = dma.done %s430, 128
        $region60: #{tpu_custom_call.1} parent=47 // pred_fallthru
          _
        %s438 = sand.u32 %s33, 1
        %s439 = scalar_lea.sflag [#allocation9], %s438
        %s440 = sand.u32 %s139, 1
        %s441 = smul.addr %s440, 8
        %s442 = scalar_lea.vmem [#allocation8], %s441
        // Predicated region
        $region61: #{tpu_custom_call.1} parent=47 // pred_check
          %p443 = pneg %p152
        $region62: #{tpu_custom_call.1} parent=47 // pred_check_branch
          %445 = sbr.rel (%p443) target = $region64
        $region63: #{tpu_custom_call.1} parent=47 // pred_region
          %446 = dma.done %s439, 128
        $region64: #{tpu_custom_call.1} parent=47 // pred_fallthru
          _
        %s447 = sand.u32 %s33, 1
        %s448 = scalar_lea.sflag [#allocation9], %s447
        %s449 = sand.u32 %s167, 1
        %s450 = smul.addr %s449, 8
        %s451 = scalar_lea.vmem [#allocation10], %s450
        // Predicated region
        $region65: #{tpu_custom_call.1} parent=47 // pred_check
          %p452 = pneg %p180
        $region66: #{tpu_custom_call.1} parent=47 // pred_check_branch
          %454 = sbr.rel (%p452) target = $region68
        $region67: #{tpu_custom_call.1} parent=47 // pred_region
          %455 = dma.done %s448, 128
        $region68: #{tpu_custom_call.1} parent=47 // pred_fallthru
          _
        %s456 = sand.u32 %s223, 1
        %s457 = scalar_lea.sflag [#allocation12], %s456
        %s458 = sand.u32 %s223, 1
        %s459 = smul.addr %s458, 8
        %s460 = scalar_lea.vmem [#allocation11], %s459
        // Predicated region
        $region69: #{tpu_custom_call.1} parent=47 // pred_check
          %p461 = pneg %p236
        $region70: #{tpu_custom_call.1} parent=47 // pred_check_branch
          %463 = sbr.rel (%p461) target = $region72
        $region71: #{tpu_custom_call.1} parent=47 // pred_region
          %464 = dma.done %s457, 128
        $region72: #{tpu_custom_call.1} parent=47 // pred_fallthru
          _
        %s465 = sand.u32 %s55, 1
        %s466 = scalar_lea.sflag [#allocation3], %s465
        %s467 = sand.u32 %s55, 1
        %s468 = smul.addr %s467, 8
        %s469 = scalar_lea.vmem [#allocation2], %s468
        %p470 = pneg %p68
        %p471 = pneg %p65
        %s472 = sand.u32 %s33, 1
        %s473 = scalar_lea.sflag [#allocation6], %s472
        %s474 = sand.u32 %s83, 1
        %s475 = smul.addr %s474, 8
        %s476 = scalar_lea.vmem [#allocation5], %s475
        %p477 = pneg %p96
        %p478 = pneg %p93
        %s479 = sand.u32 %s33, 1
        %s480 = scalar_lea.sflag [#allocation6], %s479
        %s481 = sand.u32 %s111, 1
        %s482 = smul.addr %s481, 8
        %s483 = scalar_lea.vmem [#allocation7], %s482
        %p484 = pneg %p124
        %p485 = pneg %p121
        %s486 = sand.u32 %s33, 1
        %s487 = scalar_lea.sflag [#allocation9], %s486
        %s488 = sand.u32 %s139, 1
        %s489 = smul.addr %s488, 8
        %s490 = scalar_lea.vmem [#allocation8], %s489
        %p491 = pneg %p152
        %p492 = pneg %p149
        %s493 = sand.u32 %s33, 1
        %s494 = scalar_lea.sflag [#allocation9], %s493
        %s495 = sand.u32 %s167, 1
        %s496 = smul.addr %s495, 8
        %s497 = scalar_lea.vmem [#allocation10], %s496
        %p498 = pneg %p180
        %p499 = pneg %p177
        %s500 = sadd.s32 %s37, %s38
        %p501 = scmp.lt.s32.totalorder %s500, 1
        %s502 = scalar_select %p501, %s500, 1
        %s503 = smul.addr %s502, 8
        %s504 = scalar_lea.vmem %s5, %s503
        %p505 = pneg %p208
        %p506 = pneg %p205
        %s507 = sand.u32 %s223, 1
        %s508 = scalar_lea.sflag [#allocation12], %s507
        %s509 = sand.u32 %s223, 1
        %s510 = smul.addr %s509, 8
        %s511 = scalar_lea.vmem [#allocation11], %s510
        %p512 = pneg %p236
        %p513 = pneg %p233
        %p514 = pneg %p262
        %p515 = pneg %p259
        %s516 = sand.u32 %s249, 1
        %s517 = scalar_lea.sflag [#allocation4], %s516
        %s518 = sand.u32 %s249, 1
        %s519 = smul.addr %s518, 8
        %s520 = scalar_lea.vmem [#allocation13], %s519
        %s521 = sadd.s32 %s37, %s38
        %s522 = sadd.s32 %s37, %s38
        %s523 = sadd.s32 %s37, %s38
        %s524 = sadd.s32 %s37, %s38
        %s525 = sadd.s32 %s37, %s38
        %s526 = sadd.s32 %s37, %s38
        %p527 = scmp.lt.s32.totalorder %s526, 1
        %s528 = scalar_select %p527, %s526, 1
        %s529 = smul.addr %s528, 8
        %s530 = scalar_lea.vmem %s5, %s529
        %s531 = sadd.s32 %s37, %s38
        %s532 = sadd.s32 %s37, %s38
        %p533 = scmp.eq.s32.totalorder %s38, 0
        // Predicated region
        $region73: #{tpu_custom_call.1} parent=47 // pred_check
          %p534 = pneg %p533
        $region74: #{tpu_custom_call.1} parent=47 // pred_check_branch
          %536 = sbr.rel (%p534) target = $region76
        $region75: #{tpu_custom_call.1} parent=47 // pred_region
          %537 = vst [vmem:[%s520] sm:$0xff] 0.0
        $region76: #{tpu_custom_call.1} parent=47 // pred_fallthru
          _
        %v538 = vld [vmem:[%s415] sm:$0xff]
        %v539 = vld [vmem:[%s424] sm:$0xff]
        %v540 = vld [vmem:[%s433] sm:$0xff]
        %v541 = vld [vmem:[%s442] sm:$0xff]
        %v542 = vld [vmem:[%s451] sm:$0xff]
        %v543 = vld [vmem:[%s530] sm:$0xff]
        %v544 = vld [vmem:[%s460] sm:$0xff]
        %v545 = vmax.f32 %v544, 1e-06
        %v546 = vmin.f32 %v545, 0.999999
        %v547 = vlog2.pop %v546
        %v548 = vmul.f32 %v547, 0.6931472
        %v549 = vsub.f32 1.0, %v546
        %v550 = vlog2.pop %v549
        %v551 = vmul.f32 %v550, 0.6931472
        %v552 = vadd.f32 %v538, %v539
        %v553 = vadd.f32 %v540, %v541
        %v554 = vsub.f32 %v538, 1.0
        %v555 = vmul.f32 %v554, %v548
        %v556 = vsub.f32 %v539, 1.0
        %v557 = vmul.f32 %v556, %v551
        %v558 = vadd.f32 %v555, %v557
        %v559 = vadd.f32 %v538, 6.0
        %v560 = vadd.f32 %v539, 6.0
        %v561 = vadd.f32 %v552, 6.0
        %v562 = vadd.f32 %v538, 1.0
        %v563 = vmul.f32 %v538, %v562
        %v564 = vadd.f32 %v538, 2.0
        %v565 = vmul.f32 %v563, %v564
        %v566 = vadd.f32 %v538, 3.0
        %v567 = vmul.f32 %v565, %v566
        %v568 = vadd.f32 %v538, 4.0
        %v569 = vmul.f32 %v567, %v568
        %v570 = vadd.f32 %v538, 5.0
        %v571 = vmul.f32 %v569, %v570
        %v572 = vadd.f32 %v539, 1.0
        %v573 = vmul.f32 %v539, %v572
        %v574 = vadd.f32 %v539, 2.0
        %v575 = vmul.f32 %v573, %v574
        %v576 = vadd.f32 %v539, 3.0
        %v577 = vmul.f32 %v575, %v576
        %v578 = vadd.f32 %v539, 4.0
        %v579 = vmul.f32 %v577, %v578
        %v580 = vadd.f32 %v539, 5.0
        %v581 = vmul.f32 %v579, %v580
        %v582 = vadd.f32 %v552, 1.0
        %v583 = vmul.f32 %v552, %v582
        %v584 = vadd.f32 %v552, 2.0
        %v585 = vmul.f32 %v583, %v584
        %v586 = vadd.f32 %v552, 3.0
        %v587 = vmul.f32 %v585, %v586
        %v588 = vadd.f32 %v552, 4.0
        %v589 = vmul.f32 %v587, %v588
        %v590 = vadd.f32 %v552, 5.0
        %v591 = vmul.f32 %v589, %v590
        %v592 = vsub.f32 %v559, 0.5
        %v593 = vlog2.pop %v559
        %v594 = vmul.f32 %v593, 0.6931472
        %v595 = vmul.f32 %v592, %v594
        %v596 = vsub.f32 %v560, 0.5
        %v597 = vlog2.pop %v560
        %v598 = vmul.f32 %v597, 0.6931472
        %v599 = vmul.f32 %v596, %v598
        %v600 = vadd.f32 %v595, %v599
        %v601 = vsub.f32 %v561, 0.5
        %v602 = vlog2.pop %v561
        %v603 = vmul.f32 %v602, 0.6931472
        %v604 = vmul.f32 %v601, %v603
        %v605 = vsub.f32 %v600, %v604
        %v606 = vadd.f32 %v605, -5.0810614
        %v607 = vmul.f32 %v560, %v561
        %v608 = vmul.f32 %v559, %v561
        %v609 = vadd.f32 %v607, %v608
        %v610 = vmul.f32 %v559, %v560
        %v611 = vsub.f32 %v609, %v610
        %v612 = vmul.f32 %v559, 12.0
        %v613 = vmul.f32 %v612, %v560
        %v614 = vmul.f32 %v613, %v561
        %v615 = vrcp.pop %v614
        %v616 = vmul.f32 %v611, %v615
        %v617 = vrcp.pop %v591
        %v618 = vmul.f32 %v571, %v617
        %v619 = vmul.f32 %v618, %v581
        %v620 = vlog2.pop %v619
        %v621 = vmul.f32 %v620, 0.6931472
        %v622 = vadd.f32 %v606, %v616
        %v623 = vsub.f32 %v622, %v621
        %v624 = vsub.f32 %v558, %v623
        %v625 = vsub.f32 %v540, 1.0
        %v626 = vmul.f32 %v625, %v548
        %v627 = vsub.f32 %v541, 1.0
        %v628 = vmul.f32 %v627, %v551
        %v629 = vadd.f32 %v626, %v628
        %v630 = vadd.f32 %v540, 6.0
        %v631 = vadd.f32 %v541, 6.0
        %v632 = vadd.f32 %v553, 6.0
        %v633 = vadd.f32 %v540, 1.0
        %v634 = vmul.f32 %v540, %v633
        %v635 = vadd.f32 %v540, 2.0
        %v636 = vmul.f32 %v634, %v635
        %v637 = vadd.f32 %v540, 3.0
        %v638 = vmul.f32 %v636, %v637
        %v639 = vadd.f32 %v540, 4.0
        %v640 = vmul.f32 %v638, %v639
        %v641 = vadd.f32 %v540, 5.0
        %v642 = vmul.f32 %v640, %v641
        %v643 = vadd.f32 %v541, 1.0
        %v644 = vmul.f32 %v541, %v643
        %v645 = vadd.f32 %v541, 2.0
        %v646 = vmul.f32 %v644, %v645
        %v647 = vadd.f32 %v541, 3.0
        %v648 = vmul.f32 %v646, %v647
        %v649 = vadd.f32 %v541, 4.0
        %v650 = vmul.f32 %v648, %v649
        %v651 = vadd.f32 %v541, 5.0
        %v652 = vmul.f32 %v650, %v651
        %v653 = vadd.f32 %v553, 1.0
        %v654 = vmul.f32 %v553, %v653
        %v655 = vadd.f32 %v553, 2.0
        %v656 = vmul.f32 %v654, %v655
        %v657 = vadd.f32 %v553, 3.0
        %v658 = vmul.f32 %v656, %v657
        %v659 = vadd.f32 %v553, 4.0
        %v660 = vmul.f32 %v658, %v659
        %v661 = vadd.f32 %v553, 5.0
        %v662 = vmul.f32 %v660, %v661
        %v663 = vsub.f32 %v630, 0.5
        %v664 = vlog2.pop %v630
        %v665 = vmul.f32 %v664, 0.6931472
        %v666 = vmul.f32 %v663, %v665
        %v667 = vsub.f32 %v631, 0.5
        %v668 = vlog2.pop %v631
        %v669 = vmul.f32 %v668, 0.6931472
        %v670 = vmul.f32 %v667, %v669
        %v671 = vadd.f32 %v666, %v670
        %v672 = vsub.f32 %v632, 0.5
        %v673 = vlog2.pop %v632
        %v674 = vmul.f32 %v673, 0.6931472
        %v675 = vmul.f32 %v672, %v674
        %v676 = vsub.f32 %v671, %v675
        %v677 = vadd.f32 %v676, -5.0810614
        %v678 = vmul.f32 %v631, %v632
        %v679 = vmul.f32 %v630, %v632
        %v680 = vadd.f32 %v678, %v679
        %v681 = vmul.f32 %v630, %v631
        %v682 = vsub.f32 %v680, %v681
        %v683 = vmul.f32 %v630, 12.0
        %v684 = vmul.f32 %v683, %v631
        %v685 = vmul.f32 %v684, %v632
        %v686 = vrcp.pop %v685
        %v687 = vmul.f32 %v682, %v686
        %v688 = vrcp.pop %v662
        %v689 = vmul.f32 %v642, %v688
        %v690 = vmul.f32 %v689, %v652
        %v691 = vlog2.pop %v690
        %v692 = vmul.f32 %v691, 0.6931472
        %v693 = vadd.f32 %v677, %v687
        %v694 = vsub.f32 %v693, %v692
        %v695 = vsub.f32 %v629, %v694
        %v696 = vmax.f32 %v624, %v695
        %v697 = vmin.f32 %v624, %v695
        %vm698 = vcmp.ge.f32.partialorder %v624, %v695
        %v699 = vsel %vm698, %v542, %v543
        %v700 = vsel %vm698, %v543, %v542
        %v701 = vsub.f32 %v697, %v696
        %v702 = vmul.f32 %v701, 1.442695
        %v703 = vpow.pop %v702
        %v704 = vmul.f32 %v700, %v703
        %v705 = vadd.f32 %v699, %v704
        %v706 = vlog2.pop %v705
        %v707 = vmul.f32 %v706, 0.6931472
        %v708 = vadd.f32 %v696, %v707
        %v709 = vsub.f32 0.0, %v708
        %v710 = vmul.f32 %v542, %v538
        %v711 = vmul.f32 %v710, %v553
        %v712 = vmul.f32 %v543, %v540
        %v713 = vmul.f32 %v712, %v552
        %v714 = vadd.f32 %v711, %v713
        %v715 = vmul.f32 %v552, %v553
        %v716 = vrcp.pop %v715
        %v717 = vmul.f32 %v714, %v716
        %v718 = vsub.f32 %v717, %v546
        %v719 = vand.u32 2147483647, %v718
        %v720 = vmul.f32 %v719, 0.2
        %v721 = vadd.f32 %v709, %v720
        %s722 = sadd.s32 %s37, %s38
        %s723 = smul.u32 %s722, 8
        %v724 = vlaneseq
        %v725 = vshrl.u32 %v724, 7
        %v726 = vlaneseq
        %v727 = vand.u32 %v726, 127
        %v728 = vstv %s723
        %v729 = vadd.s32 %v728, %v725
        %v730 = vmul.u32 %v729, 128
        %v731 = vadd.s32 %v730, %v727
        %vm732 = vcmp.lt.s32.totalorder %v731, 1024
        %v733 = vsel %vm732, %v721, 0.0
        %v734 = vadd.f32 %v733, 0.0
        %v735 = vld [vmem:[%s520] sm:$0xff]
        %v736 = vadd.f32 %v735, %v734
        %737 = vst [vmem:[%s520] sm:$0xff] %v736
        %s738 = sand.u32 %s249, 1
        %s739 = scalar_lea.sflag [#allocation4], %s738
        %s740 = sand.u32 %s249, 1
        %s741 = smul.addr %s740, 8
        %s742 = scalar_lea.vmem [#allocation13], %s741
        // Predicated region
        $region77: #{tpu_custom_call.1} parent=47 // pred_check
          %p743 = pneg %p259
        $region78: #{tpu_custom_call.1} parent=47 // pred_check_branch
          %745 = sbr.rel (%p743) target = $region80
        $region79: #{tpu_custom_call.1} parent=47 // pred_region
          %s747 = ssub.s32 128, 128
          %748 = vsyncadd %s739, %s747
          %s749 = smul.addr %s37, 128
          %s750 = scalar_lea.hbm %s7, %s749
          %s752 = sshll.u32 %s742, 4
          %s753 = int_to_ptr.vmem [resolvable:$true] %s752
          %755 = dma.vmem_to_hbm [thread:$0]  %s753, 128, %s750, %s739
        $region80: #{tpu_custom_call.1} parent=47 // pred_fallthru
          _
      $region48: #{tpu_custom_call.1} parent=5 // pred_fallthru
        _
      %p756 = scmp.le.s32.totalorder 2, %s28
      // Predicated region
      $region81: #{tpu_custom_call.1} parent=5 // pred_check
        %p757 = pneg %p756
      $region82: #{tpu_custom_call.1} parent=5 // pred_check_branch
        %759 = sbr.rel (%p757) target = $region84
      $region83: #{tpu_custom_call.1} parent=5 // pred_region
        %s760 = ssub.s32 %s28, 2
        // Predicated region
        $region85: #{tpu_custom_call.1} parent=83 // pred_check
          %p761 = pneg %p265
        $region86: #{tpu_custom_call.1} parent=83 // pred_check_branch
          %763 = sbr.rel (%p761) target = $region88
        $region87: #{tpu_custom_call.1} parent=83 // pred_region
          %s764 = sand.u32 %s250, 1
          %s765 = scalar_lea.sflag [#allocation4], %s764
          %s766 = sand.u32 %s250, 1
          %s767 = smul.addr %s766, 8
          %s768 = scalar_lea.vmem [#allocation13], %s767
          %769 = dma.done %s765, 128
        $region88: #{tpu_custom_call.1} parent=83 // pred_fallthru
          _
      $region84: #{tpu_custom_call.1} parent=5 // pred_fallthru
        _
    $region6: #{tpu_custom_call.1} parent=1 // loop_footer
      %s32 = sadd.s32 1, %s28
    $region7: #{tpu_custom_call.1} parent=1 // loop_footer_branch
      %27 = sbr.rel target = $region3
    $region8: #{tpu_custom_call.1} parent=1 // loop_exit
      _
    %770 = vsyncpa [#allocation3], 1
    %s771 = scalar_lea.sflag [#allocation3], 1
    %772 = vsyncpa %s771, 1
    %773 = vsyncpa [#allocation6], 1
    %s774 = scalar_lea.sflag [#allocation6], 1
    %775 = vsyncpa %s774, 1
    %776 = vsyncpa [#allocation9], 1
    %s777 = scalar_lea.sflag [#allocation9], 1
    %778 = vsyncpa %s777, 1
    %779 = vsyncpa [#allocation12], 1
    %s780 = scalar_lea.sflag [#allocation12], 1
    %781 = vsyncpa %s780, 1
    %782 = vsyncpa [#allocation4], 1
    %s783 = scalar_lea.sflag [#allocation4], 1
    %784 = vsyncpa %s783, 1

</llo_original>
